<compile_context>
chip_gen: v7x
topology: tpu7x:2x2x1
jax: 0.10.0
libtpu: 0.0.40
codegen_flags: <defaults>
</compile_context>

<pallas_src>
import functools
import numpy as np
import jax
import jax.numpy as jnp
from jax import lax
from jax.experimental import pallas as pl
from jax.experimental.pallas import tpu as pltpu


# ----------------------------- constants / generation-aware knobs -----------------------------

MXU_DTYPE = jnp.bfloat16      # MXU operands (f32 accumulation); bf16 is native on v5e/v6e/v7x.
LN_EPS = 1e-5


def _device_kind():
    try:
        return jax.devices()[0].device_kind.lower()
    except Exception:
        return ""


_KIND = _device_kind()
_IS_V7 = ("v7" in _KIND) or ("tpu7" in _KIND)
_ROW_TILE_CAP = 256 if _IS_V7 else 512          # v7x has half the VMEM (64 MiB / TC)
_VMEM_LIMIT = (48 << 20) if _IS_V7 else (96 << 20)


def _cparams(semantics):
    return pltpu.CompilerParams(dimension_semantics=semantics,
                                vmem_limit_bytes=_VMEM_LIMIT)


def _row_tile(m, cap=None):
    """Largest row tile <= cap that divides m, is a multiple of 8 and (when possible) leaves
    >= 2 grid steps so 'parallel' axes shard across TensorCores (v7x megacore)."""
    cap = _ROW_TILE_CAP if cap is None else cap
    cands = [t for t in (512, 256, 128, 64, 32, 16, 8) if t <= cap]
    for t in cands:
        if m % t == 0 and m // t >= 2:
            return t
    for t in cands:
        if m % t == 0:
            return t
    # TODO(synk): pad M to a multiple of 8 instead of collapsing to a single-step grid.
    return m


# ----------------------------- small math helpers (in-kernel) -----------------------------

def _mm_nt(a, b_nk):
    """a @ b_nk.T via dot_general contracting the last dims (PyTorch weight layout, no
    transpose materialized).  bf16 operands, f32 accumulation."""
    return lax.dot_general(a.astype(MXU_DTYPE), b_nk.astype(MXU_DTYPE),
                           (((1,), (1,)), ((), ())),
                           preferred_element_type=jnp.float32)


def _bmm_nt(a, b):
    """(B,M,K) x (B,N,K) -> (B,M,N); batched a @ b.T (flash-attention pattern)."""
    return jnp.einsum("bmk,bnk->bmn", a.astype(MXU_DTYPE), b.astype(MXU_DTYPE),
                      preferred_element_type=jnp.float32)


def _bmm_nn(a, b):
    """(B,M,K) x (B,K,N) -> (B,M,N); standard batched matmul."""
    return jnp.einsum("bmk,bkn->bmn", a.astype(MXU_DTYPE), b.astype(MXU_DTYPE),
                      preferred_element_type=jnp.float32)


def _gelu_exact(x):
    # exact (erf-based) GELU like torch.nn.GELU(); erf via Abramowitz–Stegun 7.1.26.
    # TODO(synk): switch to tanh-form GELU (EUP) if a bundle dump shows VALU binding.
    z = x * 0.7071067811865476
    a = jnp.abs(z)
    t = 1.0 / (1.0 + 0.3275911 * a)
    poly = t * (0.254829592 + t * (-0.284496736 + t * (1.421413741
             + t * (-1.453152027 + t * 1.061405429))))
    erf_a = 1.0 - poly * jnp.exp(-a * a)
    erf = jnp.where(z >= 0.0, erf_a, -erf_a)
    return 0.5 * x * (1.0 + erf)


def _layernorm_f32(x, g, b):
    mu = jnp.mean(x, axis=-1, keepdims=True)
    xc = x - mu
    var = jnp.mean(xc * xc, axis=-1, keepdims=True)
    return xc * lax.rsqrt(var + LN_EPS) * g + b


# ----------------------------- generic linear kernel (row-tiled) -----------------------------
# TODO(synk): at production MAE dims add K/N grid axes with a VMEM f32 accumulator and/or
# pipeline_mode=pl.Buffered(1) on the constant-index weight blocks (v7x VMEM residency).

def _linear_kernel(x_ref, w_ref, b_ref, o_ref):
    x = x_ref[...].astype(jnp.float32)
    y = _mm_nt(x, w_ref[...]) + b_ref[...].astype(jnp.float32)
    o_ref[...] = y.astype(o_ref.dtype)


def _linear_add_kernel(x_ref, w_ref, b_ref, a_ref, o_ref):
    x = x_ref[...].astype(jnp.float32)
    y = _mm_nt(x, w_ref[...]) + b_ref[...].astype(jnp.float32)
    y = y + a_ref[...].astype(jnp.float32)      # fused additive epilogue (e.g. pos embed)
    o_ref[...] = y.astype(o_ref.dtype)


def pallas_linear(x, w, b, add=None):
    """y = x @ w.T + b (+ add); w in (out_features, in_features) layout, pre-cast to bf16."""
    lead = x.shape[:-1]
    K = x.shape[-1]
    N = w.shape[0]
    M = int(np.prod(lead)) if lead else 1
    tm = _row_tile(M)
    x2 = x.reshape(M, K)
    b2 = b.reshape(1, N)

    in_specs = [pl.BlockSpec((tm, K), lambda i: (i, 0)),
                pl.BlockSpec((N, K), lambda i: (0, 0)),
                pl.BlockSpec((1, N), lambda i: (0, 0))]
    args = [x2, w, b2]
    kernel = _linear_kernel
    if add is not None:
        in_specs.append(pl.BlockSpec((tm, N), lambda i: (i, 0)))
        args.append(add.reshape(M, N))
        kernel = _linear_add_kernel

    out = pl.pallas_call(
        kernel,
        out_shape=jax.ShapeDtypeStruct((M, N), x.dtype),
        grid=(M // tm,),
        in_specs=in_specs,
        out_specs=pl.BlockSpec((tm, N), lambda i: (i, 0)),
        compiler_params=_cparams(("parallel",)),
    )(*args)
    return out.reshape(*lead, N)


# ----------------------------- fused pre-norm attention block -----------------------------
# x + W_out( softmax( LN(x)Wq (LN(x)Wk)^T * scale ) LN(x)Wv ) in a single kernel per batch
# element.  Heads are handled as a leading batch axis of 3-D einsums; the per-head output
# projections are accumulated (summed over the head axis), so there is no concat and no
# lane-slicing of computed activations.
# TODO(synk): at production dims (l, d >= 512) restructure as a flash-style kernel with a
# head/query grid instead of whole-sequence blocks.

def _attn_block_kernel(x_ref, g_ref, bn_ref, wqkv_ref, wout_ref, bout_ref, o_ref,
                       *, num_heads, scale):
    x = x_ref[0].astype(jnp.float32)                                     # (l, d)
    xn = _layernorm_f32(x, g_ref[...].astype(jnp.float32),
                        bn_ref[...].astype(jnp.float32))
    l, d = xn.shape
    h = num_heads

    # qkv in (3h, l, e): weight ref is already (3h, e, d); broadcast LN output along the
    # batch axis once (leading-dim broadcast, cheap) -> blessed batched a @ b.T einsum.
    xb = jnp.broadcast_to(xn.astype(MXU_DTYPE)[None], (3 * h, l, d))
    qkv = _bmm_nt(xb, wqkv_ref[...])                                     # (3h, l, e) f32
    q = qkv[0:h]
    k = qkv[h:2 * h]
    v = qkv[2 * h:3 * h]

    s = _bmm_nt(q, k) * scale                                            # (h, l, l) f32
    s = s - jnp.max(s, axis=-1, keepdims=True)
    p = jnp.exp(s)
    p = p * pl.reciprocal(jnp.sum(p, axis=-1, keepdims=True), approx=True)

    z = _bmm_nn(p, v)                                                    # (h, l, e) f32
    oh = _bmm_nt(z, wout_ref[...])                                       # (h, l, d) f32
    out = jnp.sum(oh, axis=0) + bout_ref[...].astype(jnp.float32) + x    # residual fused
    o_ref[0] = out.astype(o_ref.dtype)


def fused_attention_block(x, p, num_heads, dim_per_head):
    b, l, d = x.shape
    h, e = num_heads, dim_per_head
    scale = float(e) ** -0.5
    return pl.pallas_call(
        functools.partial(_attn_block_kernel, num_heads=h, scale=scale),
        out_shape=jax.ShapeDtypeStruct((b, l, d), x.dtype),
        grid=(b,),
        in_specs=[pl.BlockSpec((1, l, d), lambda i: (i, 0, 0)),
                  pl.BlockSpec((1, d), lambda i: (0, 0)),
                  pl.BlockSpec((1, d), lambda i: (0, 0)),
                  pl.BlockSpec((3 * h, e, d), lambda i: (0, 0, 0)),
                  pl.BlockSpec((h, d, e), lambda i: (0, 0, 0)),
                  pl.BlockSpec((1, d), lambda i: (0, 0))],
        out_specs=pl.BlockSpec((1, l, d), lambda i: (i, 0, 0)),
        compiler_params=_cparams(("parallel",)),
    )(x, p["ln_g"], p["ln_b"], p["w_qkv3"], p["w_out3"], p["b_out"])


# ----------------------------- fused pre-norm FFN block -----------------------------
# x + W2( GELU( W1 LN(x) + b1 ) ) + b2 in a single row-tiled kernel.

def _ffn_block_kernel(x_ref, g_ref, bn_ref, w1_ref, b1_ref, w2_ref, b2_ref, o_ref):
    x = x_ref[...].astype(jnp.float32)
    xn = _layernorm_f32(x, g_ref[...].astype(jnp.float32),
                        bn_ref[...].astype(jnp.float32))
    hdn = _gelu_exact(_mm_nt(xn, w1_ref[...]) + b1_ref[...].astype(jnp.float32))
    y = _mm_nt(hdn, w2_ref[...]) + b2_ref[...].astype(jnp.float32) + x   # residual fused
    o_ref[...] = y.astype(o_ref.dtype)


def fused_ffn_block(x, p):
    b, l, d = x.shape
    hid = p["w1"].shape[0]
    M = b * l
    tm = _row_tile(M)
    out = pl.pallas_call(
        _ffn_block_kernel,
        out_shape=jax.ShapeDtypeStruct((M, d), x.dtype),
        grid=(M // tm,),
        in_specs=[pl.BlockSpec((tm, d), lambda i: (i, 0)),
                  pl.BlockSpec((1, d), lambda i: (0, 0)),
                  pl.BlockSpec((1, d), lambda i: (0, 0)),
                  pl.BlockSpec((hid, d), lambda i: (0, 0)),
                  pl.BlockSpec((1, hid), lambda i: (0, 0)),
                  pl.BlockSpec((d, hid), lambda i: (0, 0)),
                  pl.BlockSpec((1, d), lambda i: (0, 0))],
        out_specs=pl.BlockSpec((tm, d), lambda i: (i, 0)),
        compiler_params=_cparams(("parallel",)),
    )(x.reshape(M, d), p["ln_g"], p["ln_b"], p["w1"], p["b1"], p["w2"], p["b2"])
    return out.reshape(b, l, d)


# ----------------------------- fused head projection + L1-mean loss -----------------------------
# pred = x @ head_w.T + head_b  AND  loss = mean(|pred - target|)  in one kernel: pred never
# makes an extra HBM round trip for the loss, and one launch is saved.

def _head_loss_kernel(x_ref, w_ref, b_ref, t_ref, o_ref, loss_ref, acc_ref, *, inv_denom):
    @pl.when(pl.program_id(0) == 0)
    def _():
        acc_ref[...] = jnp.zeros_like(acc_ref)

    x = x_ref[...].astype(jnp.float32)
    pred = _mm_nt(x, w_ref[...]) + b_ref[...].astype(jnp.float32)
    o_ref[...] = pred.astype(o_ref.dtype)

    dlt = jnp.abs(pred - t_ref[...].astype(jnp.float32))
    acc_ref[...] += jnp.sum(jnp.sum(dlt, axis=-1, keepdims=True), axis=0, keepdims=True)

    @pl.when(pl.program_id(0) == pl.num_programs(0) - 1)
    def _():
        loss_ref[...] = acc_ref[...] * inv_denom


def pallas_head_l1_loss(x, w, b, target):
    bsz, n, K = x.shape
    N = w.shape[0]
    M = bsz * n
    tm = _row_tile(M)
    pred, loss = pl.pallas_call(
        functools.partial(_head_loss_kernel, inv_denom=1.0 / float(M * N)),
        out_shape=(jax.ShapeDtypeStruct((M, N), x.dtype),
                   jax.ShapeDtypeStruct((1, 1), jnp.float32)),
        grid=(M // tm,),
        in_specs=[pl.BlockSpec((tm, K), lambda i: (i, 0)),
                  pl.BlockSpec((N, K), lambda i: (0, 0)),
                  pl.BlockSpec((1, N), lambda i: (0, 0)),
                  pl.BlockSpec((tm, N), lambda i: (i, 0))],
        out_specs=[pl.BlockSpec((tm, N), lambda i: (i, 0)),
                   pl.BlockSpec((1, 1), lambda i: (0, 0))],
        scratch_shapes=[pltpu.VMEM((1, 1), jnp.float32)],
        compiler_params=_cparams(("arbitrary",)),
    )(x.reshape(M, K), w, b.reshape(1, N), target.reshape(M, N))
    return pred.reshape(bsz, n, N), loss[0, 0]


# ----------------------------- model (JAX glue around kernels) -----------------------------

def transformer(x, layers, num_heads, dim_per_head):
    for layer in layers:
        x = fused_attention_block(x, layer["attn"], num_heads, dim_per_head)  # PreNorm(attn)+res
        x = fused_ffn_block(x, layer["ffn"])                                  # PreNorm(ffn)+res
    return x


def mae_forward(x, params, cfg, key):
    b, c, h, w = x.shape
    ph, pw = cfg["patch_h"], cfg["patch_w"]
    nh, nw = h // ph, w // pw
    num_patches = nh * nw
    patch_dim = c * ph * pw

    # i. patch partition (same view/permute/reshape as PyTorch)
    patches = x.reshape(b, c, nh, ph, nw, pw).transpose(0, 2, 4, 3, 5, 1).reshape(b, num_patches, patch_dim)

    # random masking (glue: randomness + data-dependent gather)
    num_masked = int(cfg["mask_ratio"] * num_patches)
    k_shuffle, k_noise = jax.random.split(key)
    shuffle_indices = jnp.argsort(jax.random.uniform(k_shuffle, (b, num_patches)), axis=-1)
    mask_ind = shuffle_indices[:, :num_masked]
    unmask_ind = shuffle_indices[:, num_masked:]
    batch_ind = jnp.arange(b)[:, None]
    mask_patches = patches[batch_ind, mask_ind]
    unmask_patches = patches[batch_ind, unmask_ind]

    # ii. encoder: patch embed (+ pos embed fused as additive epilogue) + transformer
    enc_p = params["enc"]
    pos = enc_p["pos_embed"][0][unmask_ind + 1]
    tok = pallas_linear(unmask_patches, enc_p["patch_embed_w"], enc_p["patch_embed_b"], add=pos)
    encoded = transformer(tok, enc_p["layers"], cfg["enc_heads"], cfg["enc_dph"])

    # iii. decoder input assembly
    # TODO(synk): fuse enc_to_dec into the last encoder FFN kernel's epilogue.
    dec_tok = pallas_linear(encoded, params["enc_to_dec_w"], params["enc_to_dec_b"])
    mask_tokens = params["mask_embed"][None, None, :] + params["dec_pos_embed"][mask_ind]
    concat_tokens = jnp.concatenate([mask_tokens, dec_tok], axis=1)
    dec_input = jnp.zeros_like(concat_tokens).at[batch_ind, shuffle_indices].set(concat_tokens)

    # iv. decoder transformer + fused head projection / L1 loss on masked positions
    decoded = transformer(dec_input, params["dec_layers"], cfg["dec_heads"], cfg["dec_dph"])
    dec_mask_tokens = decoded[batch_ind, mask_ind]
    pred, loss = pallas_head_l1_loss(dec_mask_tokens, params["head_w"], params["head_b"],
                                     mask_patches)

    # v. reconstructions
    recons_patches = patches.at[batch_ind, mask_ind].set(pred)
    recons_img = recons_patches.reshape(b, nh, nw, ph, pw, c).transpose(0, 5, 1, 3, 2, 4).reshape(b, c, h, w)

    noise = jax.random.normal(k_noise, mask_patches.shape, dtype=patches.dtype)
    patches_noised = patches.at[batch_ind, mask_ind].set(noise)
    patches_to_img = patches_noised.reshape(b, nh, nw, ph, pw, c).transpose(0, 5, 1, 3, 2, 4).reshape(b, c, h, w)

    return {"recons_img": recons_img, "patches_to_img": patches_to_img, "mask_pred_loss": loss}


# ----------------------------- parameter init + one-time HBM-side prep -----------------------------

def init_transformer_layers(key, depth, dim, hidden_dim, num_heads, dim_per_head):
    inner = num_heads * dim_per_head
    layers = []
    for _ in range(depth):
        key, k_qkv, k_out, k_w1, k_w2 = jax.random.split(key, 5)
        layers.append({
            "attn": {
                "ln_g": jnp.ones((dim,), jnp.float32),
                "ln_b": jnp.zeros((dim,), jnp.float32),
                "w_qkv": 0.02 * jax.random.normal(k_qkv, (3 * inner, dim), jnp.float32),
                "w_out": 0.02 * jax.random.normal(k_out, (dim, inner), jnp.float32),
                "b_out": jnp.zeros((dim,), jnp.float32),
            },
            "ffn": {
                "ln_g": jnp.ones((dim,), jnp.float32),
                "ln_b": jnp.zeros((dim,), jnp.float32),
                "w1": 0.02 * jax.random.normal(k_w1, (hidden_dim, dim), jnp.float32),
                "b1": jnp.zeros((hidden_dim,), jnp.float32),
                "w2": 0.02 * jax.random.normal(k_w2, (dim, hidden_dim), jnp.float32),
                "b2": jnp.zeros((dim,), jnp.float32),
            },
        })
    return layers


def init_params(key, cfg):
    enc_dim, dec_dim = cfg["enc_dim"], cfg["dec_dim"]
    c, ph, pw, img = cfg["channels"], cfg["patch_h"], cfg["patch_w"], cfg["image"]
    num_patches = (img // ph) * (img // pw)
    patch_dim = c * ph * pw
    ks = jax.random.split(key, 8)
    return {
        "enc": {
            "patch_embed_w": 0.02 * jax.random.normal(ks[0], (enc_dim, patch_dim), jnp.float32),
            "patch_embed_b": jnp.zeros((enc_dim,), jnp.float32),
            "pos_embed": jax.random.normal(ks[1], (1, num_patches + 1, enc_dim), jnp.float32),
            "layers": init_transformer_layers(ks[2], cfg["enc_depth"], enc_dim, cfg["enc_mlp"],
                                              cfg["enc_heads"], cfg["enc_dph"]),
        },
        "enc_to_dec_w": 0.02 * jax.random.normal(ks[3], (dec_dim, enc_dim), jnp.float32),
        "enc_to_dec_b": jnp.zeros((dec_dim,), jnp.float32),
        "mask_embed": jax.random.normal(ks[4], (dec_dim,), jnp.float32),
        "dec_pos_embed": jax.random.normal(ks[5], (num_patches, dec_dim), jnp.float32),
        "dec_layers": init_transformer_layers(ks[6], cfg["dec_depth"], dec_dim, dec_dim * 4,
                                              cfg["dec_heads"], cfg["dec_dph"]),
        "head_w": 0.02 * jax.random.normal(ks[7], (patch_dim, dec_dim), jnp.float32),
        "head_b": jnp.zeros((patch_dim,), jnp.float32),
    }


def prepare_params(params, cfg):
    """One-time conversion in HBM: matmul weights -> bf16; attention weights -> per-head
    layouts ((3h, dph, d) for qkv, (h, d, dph) for the output projection) so kernels never
    transpose, reshape or cast resident weight blocks inside the grid loop."""
    def prep_layers(layers, heads, dph):
        out = []
        for layer in layers:
            a, f = layer["attn"], layer["ffn"]
            d = a["w_out"].shape[0]
            hid = f["w1"].shape[0]
            out.append({
                "attn": {
                    "ln_g": a["ln_g"].reshape(1, d),
                    "ln_b": a["ln_b"].reshape(1, d),
                    "w_qkv3": a["w_qkv"].astype(MXU_DTYPE).reshape(3 * heads, dph, d),
                    "w_out3": jnp.transpose(
                        a["w_out"].astype(MXU_DTYPE).reshape(d, heads, dph), (1, 0, 2)),
                    "b_out": a["b_out"].reshape(1, d),
                },
                "ffn": {
                    "ln_g": f["ln_g"].reshape(1, d),
                    "ln_b": f["ln_b"].reshape(1, d),
                    "w1": f["w1"].astype(MXU_DTYPE),
                    "b1": f["b1"].reshape(1, hid),
                    "w2": f["w2"].astype(MXU_DTYPE),
                    "b2": f["b2"].reshape(1, d),
                },
            })
        return out

    p = dict(params)
    enc = dict(p["enc"])
    enc["patch_embed_w"] = enc["patch_embed_w"].astype(MXU_DTYPE)
    enc["layers"] = prep_layers(enc["layers"], cfg["enc_heads"], cfg["enc_dph"])
    p["enc"] = enc
    p["enc_to_dec_w"] = p["enc_to_dec_w"].astype(MXU_DTYPE)
    p["dec_layers"] = prep_layers(p["dec_layers"], cfg["dec_heads"], cfg["dec_dph"])
    p["head_w"] = p["head_w"].astype(MXU_DTYPE)
    return p


# ----------------------------- main -----------------------------

if __name__ == "__main__":
    cfg = dict(
        image=16, channels=4, patch_h=4, patch_w=4, mask_ratio=0.75,
        enc_dim=32, enc_depth=2, enc_heads=4, enc_dph=8, enc_mlp=64,
        dec_dim=16, dec_depth=1, dec_heads=4, dec_dph=8,
    )
    key = jax.random.PRNGKey(0)
    k_param, k_x, k_fwd = jax.random.split(key, 3)

    params = prepare_params(init_params(k_param, cfg), cfg)
    x = jax.random.normal(k_x, (2, cfg["channels"], cfg["image"], cfg["image"]), jnp.float32)

    out = mae_forward(x, params, cfg, k_fwd)
    out = jax.block_until_ready(out)

    assert out["recons_img"].shape == x.shape
    assert out["patches_to_img"].shape == x.shape
    assert out["mask_pred_loss"].shape == ()
    assert bool(jnp.isfinite(out["mask_pred_loss"]))

    print("KERNEL_OK")
</pallas_src>

<mosaic_0001>
module attributes {stable_mosaic.version = 11 : i64} {
  func.func @_linear_add_kernel(%arg0: i32, %arg1: memref<8x64xf32, #tpu.memory_space<vmem>>, %arg2: memref<32x64xbf16, #tpu.memory_space<vmem>>, %arg3: memref<1x32xf32, #tpu.memory_space<vmem>>, %arg4: memref<8x32xf32, #tpu.memory_space<vmem>>, %arg5: memref<8x32xf32, #tpu.memory_space<vmem>>) attributes {dimension_semantics = [#tpu.dimension_semantics<parallel>], iteration_bounds = array<i64: 1>, scalar_prefetch = 0 : i64, scratch_operands = 0 : i64, tpu.core_type = #tpu.core_type<tc>, window_params = [{transform_indices = @transform_0, window_bounds = array<i64: 8, 64>}, {pipeline_mode = #tpu.pipeline_mode<synchronous>, transform_indices = @transform_1, window_bounds = array<i64: 32, 64>}, {pipeline_mode = #tpu.pipeline_mode<synchronous>, transform_indices = @transform_2, window_bounds = array<i64: 1, 32>}, {transform_indices = @transform_3, window_bounds = array<i64: 8, 32>}, {transform_indices = @transform_4, window_bounds = array<i64: 8, 32>}]} {
    %c0 = arith.constant 0 : index
    %c0_0 = arith.constant 0 : index
    %0 = vector.load %arg1[%c0, %c0_0] : memref<8x64xf32, #tpu.memory_space<vmem>>, vector<8x64xf32>
    %c0_1 = arith.constant 0 : index
    %c0_2 = arith.constant 0 : index
    %1 = vector.load %arg2[%c0_1, %c0_2] : memref<32x64xbf16, #tpu.memory_space<vmem>>, vector<32x64xbf16>
    %2 = arith.truncf %0 : vector<8x64xf32> to vector<8x64xbf16>
    %cst = arith.constant dense<0.000000e+00> : vector<8x32xf32>
    %3 = tpu.matmul %2, %1, %cst {dimension_numbers = #tpu.dot_dimension_numbers<[1], [1], [0], [0], [0, 0, 1, 0], [], []>} : vector<8x64xbf16>, vector<32x64xbf16>, vector<8x32xf32> -> vector<8x32xf32>
    %c0_3 = arith.constant 0 : index
    %c0_4 = arith.constant 0 : index
    %4 = vector.load %arg3[%c0_3, %c0_4] : memref<1x32xf32, #tpu.memory_space<vmem>>, vector<1x32xf32>
    %5 = vector.broadcast %4 : vector<1x32xf32> to vector<8x32xf32>
    %6 = arith.addf %3, %5 : vector<8x32xf32>
    %c0_5 = arith.constant 0 : index
    %c0_6 = arith.constant 0 : index
    %7 = vector.load %arg4[%c0_5, %c0_6] : memref<8x32xf32, #tpu.memory_space<vmem>>, vector<8x32xf32>
    %8 = arith.addf %6, %7 : vector<8x32xf32>
    %c0_7 = arith.constant 0 : index
    %c0_8 = arith.constant 0 : index
    %9 = vector.load %arg5[%c0_7, %c0_8] : memref<8x32xf32, #tpu.memory_space<vmem>>, vector<8x32xf32>
    tpu.vector_store %arg5[%c0_7, %c0_8], %8 {strides = array<i32>} : memref<8x32xf32, #tpu.memory_space<vmem>>, vector<8x32xf32>,
    return
  }
  func.func @transform_0(%arg0: i32) -> (i32, i32) {
    %c0_i32 = arith.constant 0 : i32
    %c0_i32_0 = arith.constant 0 : i32
    return %arg0, %c0_i32 : i32, i32
  }
  func.func @transform_1(%arg0: i32) -> (i32, i32) {
    %c0_i32 = arith.constant 0 : i32
    %c0_i32_0 = arith.constant 0 : i32
    %c0_i32_1 = arith.constant 0 : i32
    return %c0_i32, %c0_i32_0 : i32, i32
  }
  func.func @transform_2(%arg0: i32) -> (i32, i32) {
    %c0_i32 = arith.constant 0 : i32
    %c0_i32_0 = arith.constant 0 : i32
    %c0_i32_1 = arith.constant 0 : i32
    return %c0_i32, %c0_i32_0 : i32, i32
  }
  func.func @transform_3(%arg0: i32) -> (i32, i32) {
    %c0_i32 = arith.constant 0 : i32
    %c0_i32_0 = arith.constant 0 : i32
    return %arg0, %c0_i32 : i32, i32
  }
  func.func @transform_4(%arg0: i32) -> (i32, i32) {
    %c0_i32 = arith.constant 0 : i32
    %c0_i32_0 = arith.constant 0 : i32
    return %arg0, %c0_i32 : i32, i32
  }
}

</mosaic_0001>

<llo_original>
// kernel: tpu_custom_call.1
$region0: #{tpu_custom_call.1}
  #allocation0 [shape = 'u32[]', space=smem, size = 0x4, offset = 0x4, fixed_abs, tag = 'smem constant byte address 0x4 - core index']
  #allocation1 [shape = 'u32[144,128]{1,0:T(1,128)}', space=vmem, size = 0x12000, scoped, tag = 'internal scratch']
  %s0 = inlined_call_operand.hbm [shape: f32[8,64], index: 0, kind: input, shape index: {}]
  %s1 = inlined_call_operand.hbm [shape: bf16[32,64], index: 1, kind: input, shape index: {}]
  %s2 = inlined_call_operand.hbm [shape: f32[1,32], index: 2, kind: input, shape index: {}]
  %s3 = inlined_call_operand.hbm [shape: f32[8,32], index: 3, kind: input, shape index: {}]
  %s4 = inlined_call_operand.hbm [shape: f32[8,32], index: 4, kind: output, shape index: {}]
  %s5 = sld [smem:[#allocation0]]
  $region42: #{tpu_custom_call.1} parent=0
    _
  %s7 = ssub.s32 1, %s5
  %s8 = scalar_select 0, %s7, %s5
  $region1: #{tpu_custom_call.1} parent=0
    #allocation2 [shape = 'u8[4096]{0}', space=vmem, size = 0x1000, scoped, tag = 'input window, operand 0, single buffered']
    #allocation3 [shape = 's32[1]{0}', space=sflag, size = 0x4, scoped, tag = 'scoped memory for tpu_custom_call.1']
    #allocation4 [shape = 's32[1]{0}', space=sflag, size = 0x4, scoped, tag = 'scoped memory for tpu_custom_call.1']
    #allocation5 [shape = 'u8[8192]{0}', space=vmem, size = 0x2000, scoped, tag = 'input window, operand 1, single buffered']
    #allocation6 [shape = 's32[1]{0}', space=sflag, size = 0x4, scoped, tag = 'scoped memory for tpu_custom_call.1']
    #allocation7 [shape = 'u8[512]{0}', space=vmem, size = 0x400, scoped, tag = 'input window, operand 2, single buffered']
    #allocation8 [shape = 'u8[4096]{0}', space=vmem, size = 0x1000, scoped, tag = 'input window, operand 3, single buffered']
    #allocation9 [shape = 's32[1]{0}', space=sflag, size = 0x4, scoped, tag = 'scoped memory for tpu_custom_call.1']
    #allocation10 [shape = 'u8[4096]{0}', space=vmem, size = 0x1000, scoped, tag = 'output window, operand 0, single buffered']
    %9 = vsyncpa [#allocation3], 0
    %10 = vsyncpa [#allocation6], 0
    %11 = vsyncpa [#allocation9], 0
    %12 = vsyncpa [#allocation4], 0
    // Predicated region
    $region2: #{tpu_custom_call.1} parent=1 // pred_check
      _
    $region3: #{tpu_custom_call.1} parent=1 // pred_check_branch
      %14 = sbr.rel (0) target = $region5
    $region4: #{tpu_custom_call.1} parent=1 // pred_region
      %s16 = ssub.s32 128, 128
      %17 = vsyncadd [#allocation3], %s16
      %s19 = sshll.u32 [#allocation2], 4
      %s20 = int_to_ptr.vmem [resolvable:$true] %s19
      %22 = dma.hbm_to_vmem [thread:$0]  %s0, 128, %s20, [#allocation3]
    $region5: #{tpu_custom_call.1} parent=1 // pred_fallthru
      _
    // Predicated region
    $region6: #{tpu_custom_call.1} parent=1 // pred_check
      _
    $region7: #{tpu_custom_call.1} parent=1 // pred_check_branch
      %24 = sbr.rel (0) target = $region9
    $region8: #{tpu_custom_call.1} parent=1 // pred_region
      %s26 = ssub.s32 256, 256
      %27 = vsyncadd [#allocation6], %s26
      %s28 = sshll.u32 [#allocation5], 4
      %s29 = int_to_ptr.vmem [resolvable:$true] %s28
      %34 = dma.hbm_to_vmem [thread:$0]  %s1, 256, %s29, [#allocation6], 64, 64, 4
    $region9: #{tpu_custom_call.1} parent=1 // pred_fallthru
      _
    // Predicated region
    $region10: #{tpu_custom_call.1} parent=1 // pred_check
      _
    $region11: #{tpu_custom_call.1} parent=1 // pred_check_branch
      %36 = sbr.rel (0) target = $region13
    $region12: #{tpu_custom_call.1} parent=1 // pred_region
      %s38 = ssub.s32 16, 16
      %39 = vsyncadd [#allocation6], %s38
      %s41 = sshll.u32 [#allocation7], 4
      %s42 = int_to_ptr.vmem [resolvable:$true] %s41
      %44 = dma.hbm_to_vmem [thread:$0]  %s2, 16, %s42, [#allocation6]
    $region13: #{tpu_custom_call.1} parent=1 // pred_fallthru
      _
    // Predicated region
    $region14: #{tpu_custom_call.1} parent=1 // pred_check
      _
    $region15: #{tpu_custom_call.1} parent=1 // pred_check_branch
      %46 = sbr.rel (0) target = $region17
    $region16: #{tpu_custom_call.1} parent=1 // pred_region
      %s48 = ssub.s32 128, 128
      %49 = vsyncadd [#allocation9], %s48
      %s51 = sshll.u32 [#allocation8], 4
      %s52 = int_to_ptr.vmem [resolvable:$true] %s51
      %54 = dma.hbm_to_vmem [thread:$0]  %s3, 128, %s52, [#allocation9]
    $region17: #{tpu_custom_call.1} parent=1 // pred_fallthru
      _
    // Predicated region
    $region18: #{tpu_custom_call.1} parent=1 // pred_check
      _
    $region19: #{tpu_custom_call.1} parent=1 // pred_check_branch
      %56 = sbr.rel (0) target = $region21
    $region20: #{tpu_custom_call.1} parent=1 // pred_region
      %57 = dma.done [#allocation3], 128
    $region21: #{tpu_custom_call.1} parent=1 // pred_fallthru
      _
    // Predicated region
    $region22: #{tpu_custom_call.1} parent=1 // pred_check
      _
    $region23: #{tpu_custom_call.1} parent=1 // pred_check_branch
      %59 = sbr.rel (0) target = $region25
    $region24: #{tpu_custom_call.1} parent=1 // pred_region
      %60 = dma.done [#allocation6], 256
    $region25: #{tpu_custom_call.1} parent=1 // pred_fallthru
      _
    // Predicated region
    $region26: #{tpu_custom_call.1} parent=1 // pred_check
      _
    $region27: #{tpu_custom_call.1} parent=1 // pred_check_branch
      %62 = sbr.rel (0) target = $region29
    $region28: #{tpu_custom_call.1} parent=1 // pred_region
      %63 = dma.done [#allocation6], 16
    $region29: #{tpu_custom_call.1} parent=1 // pred_fallthru
      _
    // Predicated region
    $region30: #{tpu_custom_call.1} parent=1 // pred_check
      _
    $region31: #{tpu_custom_call.1} parent=1 // pred_check_branch
      %65 = sbr.rel (0) target = $region33
    $region32: #{tpu_custom_call.1} parent=1 // pred_region
      %66 = dma.done [#allocation9], 128
    $region33: #{tpu_custom_call.1} parent=1 // pred_fallthru
      _
    %v68 = vld [vmem:[#allocation2] sm:$0xff]
    %v69 = vld [vmem:[#allocation5] sm:$0xf]
    %v70 = vld [vmem:[#allocation5 + $0x4] sm:$0xf]
    %v71 = vld [vmem:[#allocation5 + $0x8] sm:$0xf]
    %v72 = vld [vmem:[#allocation5 + $0xc] sm:$0xf]
    %v73 = vpack.c.bf16 %v68, %v68
    %v74 = vld [vmem:[#allocation7] sm:$0x1]
    %v76 = vlaneseq
    %v77 = vshrl.u32 %v76, 7
    %v78 = vsub.s32 0, %v77
    %v79 = vrot.slane %v74, %v78
    %v85 = vunpack.c.l.b16 %v69
    %v86 = vunpack.c.l.b16 %v70
    %v87 = vunpack.c.l.b16 %v71
    %v88 = vunpack.c.l.b16 %v72
    %v89 = vpack.c.b16 %v86, %v85
    %v90 = vpack.c.b16 %v88, %v87
    %vm91 = vcmask 523264
    %v93 = vsel %vm91, %v73, 0
    %v96 = vsel %vm91, %v89, 0
    %v99 = vsel %vm91, %v90, 0
    %101 = vmatprep.subr.bf16.mxu0 0
    %102 = vmatpush1.bf16.xpose.msra.mxu0 %v96
    %103 = vmatprep.subr.bf16.mxu0 0
    %104 = vmatpush1.bf16.xpose.msra.mxu0 %v99
    %105 = vmatprep.subr.bf16.mxu0 0
    %106 = vmatpush1.bf16.xpose.msra.mxu0 0
    %107 = vmatprep.subr.bf16.mxu0 0
    %108 = vmatpush1.bf16.xpose.msra.mxu0 0
    %109 = vmatprep.subr.bf16.mxu0 0
    %110 = vmatpush1.bf16.xpose.msra.mxu0 0
    %111 = vmatprep.subr.bf16.mxu0 0
    %112 = vmatpush1.bf16.xpose.msra.mxu0 0
    %113 = vmatprep.subr.bf16.mxu0 0
    %114 = vmatpush1.bf16.xpose.msra.mxu0 0
    %115 = vmatprep.subr.bf16.mxu0 0
    %116 = vmatpush1.bf16.xpose.msra.mxu0 0
    %117 = vmatprep.subr.bf16.mxu0 0
    %118 = vmatpush1.bf16.xpose.msra.mxu0 0
    %119 = vmatprep.subr.bf16.mxu0 0
    %120 = vmatpush1.bf16.xpose.msra.mxu0 0
    %121 = vmatprep.subr.bf16.mxu0 0
    %122 = vmatpush1.bf16.xpose.msra.mxu0 0
    %123 = vmatprep.subr.bf16.mxu0 0
    %124 = vmatpush1.bf16.xpose.msra.mxu0 0
    %125 = vmatprep.subr.bf16.mxu0 0
    %126 = vmatpush1.bf16.xpose.msra.mxu0 0
    %127 = vmatprep.subr.bf16.mxu0 0
    %128 = vmatpush1.bf16.xpose.msra.mxu0 0
    %129 = vmatprep.subr.bf16.mxu0 0
    %130 = vmatpush1.bf16.xpose.msra.mxu0 0
    %131 = vmatprep.subr.bf16.mxu0 0
    %132 = vmatpush1.bf16.xpose.msra.mxu0 0
    %133 = vmatprep.mubr.bf16.mxu0 0
    %134 = vmatmul.mubr.bf16.gmra.mrb[0].mxu0 %v93
    %v135 = vpop.f32.mrb[0].mxu0
    %v136 = vadd.f32 %v79, %v135
    %v137 = vpop.f32.mrb[0].mxu0
    %v138 = vpop.f32.mrb[0].mxu0
    %v139 = vpop.f32.mrb[0].mxu0
    %140 = vdwg.mxu0
    %v141 = vld [vmem:[#allocation8] sm:$0xff]
    %v142 = vadd.f32 %v136, %v141
    %vm143 = vcmask 261120
    %144 = vst.msk [vmem:[#allocation10] sm:$0xff] %vm143, %v142
    // Predicated region
    $region34: #{tpu_custom_call.1} parent=1 // pred_check
      _
    $region35: #{tpu_custom_call.1} parent=1 // pred_check_branch
      %146 = sbr.rel (0) target = $region37
    $region36: #{tpu_custom_call.1} parent=1 // pred_region
      %s148 = ssub.s32 128, 128
      %149 = vsyncadd [#allocation4], %s148
      %s151 = sshll.u32 [#allocation10], 4
      %s152 = int_to_ptr.vmem [resolvable:$true] %s151
      %154 = dma.vmem_to_hbm [thread:$0]  %s152, 128, %s4, [#allocation4]
    $region37: #{tpu_custom_call.1} parent=1 // pred_fallthru
      _
    // Predicated region
    $region38: #{tpu_custom_call.1} parent=1 // pred_check
      _
    $region39: #{tpu_custom_call.1} parent=1 // pred_check_branch
      %156 = sbr.rel (0) target = $region41
    $region40: #{tpu_custom_call.1} parent=1 // pred_region
      %157 = dma.done [#allocation4], 128
    $region41: #{tpu_custom_call.1} parent=1 // pred_fallthru
      _
    %158 = vsyncpa [#allocation3], 1
    %159 = vsyncpa [#allocation6], 1
    %160 = vsyncpa [#allocation9], 1
    %161 = vsyncpa [#allocation4], 1

</llo_original>
